<compile_context>
chip_gen: v7x
topology: tpu7x:2x2x1
jax: 0.10.0
libtpu: 0.0.40
codegen_flags: <defaults>
</compile_context>

<pallas_src>
from collections import defaultdict
from functools import partial

import jax
import jax.numpy as jnp
from jax import lax
from jax.experimental import pallas as pl
from jax.experimental.pallas import tpu as pltpu


_LANE = 128  # lane width / bucket granularity


def _round_up(x, m):
    return ((x + m - 1) // m) * m


def _pick_tile(n_pad):
    # padded dims are multiples of 128; prefer 256 tiles when they divide.
    return 256 if n_pad % 256 == 0 else 128


# ---------------------------------------------------------------------------
# Feature preparation (done once per utterance, outside the kernel):
# L2-normalize rows, cast to bf16, pad time & feature dims to 128 multiples.
# ---------------------------------------------------------------------------
def prepare_feature(feature, eps=1e-8):
    x = jnp.asarray(feature, jnp.float32)
    T, D = x.shape
    norm = jnp.sqrt(jnp.sum(x * x, axis=-1, keepdims=True))
    # torch.nn.functional.cosine_similarity clamps each norm with eps
    xn = (x / jnp.maximum(norm, jnp.float32(eps))).astype(jnp.bfloat16)
    T_pad = _round_up(max(T, 1), _LANE)
    D_pad = _round_up(max(D, 1), _LANE)
    xn = jnp.pad(xn, ((0, T_pad - T), (0, D_pad - D)))
    return xn, T


# ---------------------------------------------------------------------------
# Pallas kernel: negative-cosine-similarity distance matrix on pre-normalized
# bf16 features.  dist[i, j] = 1 - <qn_i, dn_j>
# ---------------------------------------------------------------------------
def _neg_cos_kernel(q_ref, d_ref, o_ref):
    # q_ref: [tq_tile, Dp] bf16 (rows unit-norm), d_ref: [td_tile, Dp] bf16
    dots = lax.dot_general(
        q_ref[...], d_ref[...],
        dimension_numbers=(((1,), (1,)), ((), ())),   # contract feature dim
        preferred_element_type=jnp.float32,           # f32 MXU accumulator
    )
    o_ref[...] = jnp.float32(1.0) - dots


@partial(jax.jit, static_argnames=("tq_tile", "td_tile"))
def _neg_cosine_matrix(qn, dn, *, tq_tile, td_tile):
    Tq, Dp = qn.shape
    Td, _ = dn.shape
    grid = (Tq // tq_tile, Td // td_tile)
    # VMEM budget (worst realistic case: tile=256, D=1024 bf16):
    #   inputs  2 arrays * 2 buffers * 256*1024*2B = 2 MiB
    #   output  2 buffers * 256*256*4B             = 0.5 MiB
    # -> comfortably under the 32 MiB scoped default on every generation
    #    (including v7x's 64 MiB physical VMEM).
    return pl.pallas_call(
        _neg_cos_kernel,
        out_shape=jax.ShapeDtypeStruct((Tq, Td), jnp.float32),
        grid_spec=pltpu.PrefetchScalarGridSpec(
            num_scalar_prefetch=0,
            grid=grid,
            in_specs=[
                pl.BlockSpec((tq_tile, Dp), lambda i, j: (i, 0)),
                pl.BlockSpec((td_tile, Dp), lambda i, j: (j, 0)),
            ],
            # lane-dense output: td_tile is a multiple of 128 (unmasked vst)
            out_specs=pl.BlockSpec((tq_tile, td_tile), lambda i, j: (i, j)),
        ),
        compiler_params=pltpu.CompilerParams(
            dimension_semantics=("parallel", "parallel")),
    )(qn, dn)


def pallas_cosine_distance(query_f32, doc_f32):
    """Convenience wrapper: raw [T, D] f32 features -> [Tq, Td] f32 distances."""
    qn, Tq = prepare_feature(query_f32)
    dn, Td = prepare_feature(doc_f32)
    dist_pad = _neg_cosine_matrix(
        qn, dn, tq_tile=_pick_tile(qn.shape[0]), td_tile=_pick_tile(dn.shape[0]))
    return dist_pad[:Tq, :Td]


# ---------------------------------------------------------------------------
# DTW dynamic program (sequential recurrence) kept as plain-JAX glue.
# TODO(synk): exact `segmental_dtw` (subsequence DTW + path normalization) is
# not given in the reference; a standard DTW DP is used here, and the
# per-element recurrence has no clean Pallas hot-path equivalent.
# ---------------------------------------------------------------------------
def dtw_cost(dist):
    dist = dist.astype(jnp.float32)
    big = jnp.float32(1e30)

    row0 = jnp.cumsum(dist[0])

    def row_step(prev, d_row):
        up = prev                                                  # acc[i-1, j]
        diag = jnp.concatenate([jnp.full((1,), big), prev[:-1]])   # acc[i-1, j-1]

        def col_step(left, xs):
            d, u, dg = xs
            cur = d + jnp.minimum(jnp.minimum(left, u), dg)
            return cur, cur

        _, row = lax.scan(col_step, big, (d_row, up, diag))
        return row, None

    last, _ = lax.scan(row_step, row0, dist[1:])
    return last[-1]


# ---------------------------------------------------------------------------
# DownstreamExpert equivalent
# ---------------------------------------------------------------------------
class DownstreamExpertPallas:
    def __init__(self, upstream_dim: int):
        self.upstream_dim = upstream_dim
        self._norm_cache = {}
        # TODO(synk): QUESST14Dataset / DataLoader / expdir XML writing are
        # pure host-side I/O with no Pallas equivalent; omitted.

    def forward(self, features, audio_names, records, **kwargs):
        for feature, audio_name in zip(features, audio_names):
            # torch: feature.detach().cpu().numpy().astype(np.double)
            # TODO(synk): no float64 on TPU; a plain f32 copy/cast replaces it
            # (no Pallas kernel -- pure data movement is faster as an XLA op).
            records["features"].append(jnp.asarray(feature, jnp.float32))
            records["audio_names"].append(audio_name)
        return jnp.zeros(1)

    def _prepared(self, feature):
        # normalized+padded features are cached so doc prep is shared across
        # every (query, doc) pair instead of recomputed per match().
        key = id(feature)
        if key not in self._norm_cache:
            self._norm_cache[key] = prepare_feature(feature)
        return self._norm_cache[key]

    def match(self, query, doc, query_name, doc_name):
        qn, Tq = self._prepared(query)
        dn, Td = self._prepared(doc)
        dist_pad = _neg_cosine_matrix(
            qn, dn,
            tq_tile=_pick_tile(qn.shape[0]),
            td_tile=_pick_tile(dn.shape[0]))
        dist = dist_pad[:Tq, :Td]     # drop padded rows/cols before the DP
        cost = dtw_cost(dist)
        return (query_name, doc_name, -1.0 * cost)


# ---------------------------------------------------------------------------
# Pure-JAX reference for the distance matrix (correctness check only)
# ---------------------------------------------------------------------------
def _cosine_distance_ref(q, d, eps=1e-8):
    q = q.astype(jnp.float32)
    d = d.astype(jnp.float32)
    qn = q / jnp.maximum(jnp.linalg.norm(q, axis=-1, keepdims=True), eps)
    dn = d / jnp.maximum(jnp.linalg.norm(d, axis=-1, keepdims=True), eps)
    return 1.0 - qn @ dn.T


if __name__ == "__main__":
    key = jax.random.PRNGKey(0)
    D = 32                       # upstream_dim
    k1, k2, k3 = jax.random.split(key, 3)
    # 1 query + 2 docs, variable length frame sequences
    features = [
        jax.random.normal(k1, (16, D), jnp.float32),   # query
        jax.random.normal(k2, (24, D), jnp.float32),   # doc 1
        jax.random.normal(k3, (20, D), jnp.float32),   # doc 2
    ]
    audio_names = ["query_0001.wav", "doc_0001.wav", "doc_0002.wav"]

    expert = DownstreamExpertPallas(upstream_dim=D)
    records = defaultdict(list)

    # forward pass
    loss = expert.forward(features, audio_names, records)
    jax.block_until_ready(loss)
    assert loss.shape == (1,) and float(loss[0]) == 0.0
    for f in records["features"]:
        jax.block_until_ready(f)
        assert f.dtype == jnp.float32

    # kernel correctness check against a pure-JAX reference (bf16 tolerance)
    dist_pallas = pallas_cosine_distance(records["features"][0],
                                         records["features"][1])
    dist_ref = _cosine_distance_ref(records["features"][0],
                                    records["features"][1])
    jax.block_until_ready(dist_pallas)
    assert dist_pallas.shape == dist_ref.shape
    assert bool(jnp.allclose(dist_pallas, dist_ref, atol=2e-2, rtol=0.0))

    # log_records-style matching (n_queries = 1)
    query = records["features"][0]
    query_name = records["audio_names"][0].replace(".wav", "")
    results = []
    for doc, doc_name in zip(records["features"][1:], records["audio_names"][1:]):
        qn, dn, score = expert.match(query, doc, query_name,
                                     doc_name.replace(".wav", ""))
        score = jax.block_until_ready(score)
        results.append((qn, dn, float(score)))

    assert len(results) == 2
    for _, _, s in results:
        assert s == s  # no NaNs
    print("KERNEL_OK")
</pallas_src>

<mosaic_0001>
module attributes {stable_mosaic.version = 11 : i64} {
  func.func @_neg_cos_kernel(%arg0: i32, %arg1: i32, %arg2: memref<128x128xbf16, #tpu.memory_space<vmem>>, %arg3: memref<128x128xbf16, #tpu.memory_space<vmem>>, %arg4: memref<128x128xf32, #tpu.memory_space<vmem>>) attributes {dimension_semantics = [#tpu.dimension_semantics<parallel>, #tpu.dimension_semantics<parallel>], iteration_bounds = array<i64: 1, 1>, scalar_prefetch = 0 : i64, scratch_operands = 0 : i64, tpu.core_type = #tpu.core_type<tc>, window_params = [{transform_indices = @transform_0, window_bounds = array<i64: 128, 128>}, {transform_indices = @transform_1, window_bounds = array<i64: 128, 128>}, {transform_indices = @transform_2, window_bounds = array<i64: 128, 128>}]} {
    %c0 = arith.constant 0 : index
    %c0_0 = arith.constant 0 : index
    %0 = vector.load %arg2[%c0, %c0_0] : memref<128x128xbf16, #tpu.memory_space<vmem>>, vector<128x128xbf16>
    %c0_1 = arith.constant 0 : index
    %c0_2 = arith.constant 0 : index
    %1 = vector.load %arg3[%c0_1, %c0_2] : memref<128x128xbf16, #tpu.memory_space<vmem>>, vector<128x128xbf16>
    %cst = arith.constant dense<0.000000e+00> : vector<128x128xf32>
    %2 = tpu.matmul %0, %1, %cst {dimension_numbers = #tpu.dot_dimension_numbers<[1], [1], [0], [0], [0, 0, 1, 0], [], []>} : vector<128x128xbf16>, vector<128x128xbf16>, vector<128x128xf32> -> vector<128x128xf32>
    %cst_3 = arith.constant 1.000000e+00 : f32
    %3 = vector.broadcast %cst_3 : f32 to vector<128x128xf32>
    %4 = arith.subf %3, %2 : vector<128x128xf32>
    %c0_4 = arith.constant 0 : index
    %c0_5 = arith.constant 0 : index
    %5 = vector.load %arg4[%c0_4, %c0_5] : memref<128x128xf32, #tpu.memory_space<vmem>>, vector<128x128xf32>
    tpu.vector_store %arg4[%c0_4, %c0_5], %4 {strides = array<i32>} : memref<128x128xf32, #tpu.memory_space<vmem>>, vector<128x128xf32>,
    return
  }
  func.func @transform_0(%arg0: i32, %arg1: i32) -> (i32, i32) {
    %c0_i32 = arith.constant 0 : i32
    %c0_i32_0 = arith.constant 0 : i32
    return %arg0, %c0_i32 : i32, i32
  }
  func.func @transform_1(%arg0: i32, %arg1: i32) -> (i32, i32) {
    %c0_i32 = arith.constant 0 : i32
    %c0_i32_0 = arith.constant 0 : i32
    return %arg1, %c0_i32 : i32, i32
  }
  func.func @transform_2(%arg0: i32, %arg1: i32) -> (i32, i32) {
    %c0_i32 = arith.constant 0 : i32
    return %arg0, %arg1 : i32, i32
  }
}

</mosaic_0001>

<llo_original>
// kernel: _neg_cosine_matrix.1
$region0: #{_neg_cosine_matrix.1}
  #allocation0 [shape = 'u32[]', space=smem, size = 0x4, offset = 0x4, fixed_abs, tag = 'smem constant byte address 0x4 - core index']
  #allocation1 [shape = 'u32[144,128]{1,0:T(1,128)}', space=vmem, size = 0x12000, scoped, tag = 'internal scratch']
  %s0 = inlined_call_operand.hbm [shape: bf16[128,128], index: 0, kind: input, shape index: {}]
  %s1 = inlined_call_operand.hbm [shape: bf16[128,128], index: 1, kind: input, shape index: {}]
  %s2 = inlined_call_operand.hbm [shape: f32[128,128], index: 2, kind: output, shape index: {}]
  %s3 = sld [smem:[#allocation0]]
  $region26: #{_neg_cosine_matrix.1} parent=0
    _
  %s5 = ssub.s32 1, %s3
  %s6 = scalar_select 0, %s5, %s3
  $region1: #{_neg_cosine_matrix.1} parent=0
    #allocation2 [shape = 'u8[32768]{0}', space=vmem, size = 0x8000, scoped, tag = 'input window, operand 0, single buffered']
    #allocation3 [shape = 's32[1]{0}', space=sflag, size = 0x4, scoped, tag = 'scoped memory for _neg_cosine_matrix.1']
    #allocation4 [shape = 's32[1]{0}', space=sflag, size = 0x4, scoped, tag = 'scoped memory for _neg_cosine_matrix.1']
    #allocation5 [shape = 'u8[32768]{0}', space=vmem, size = 0x8000, scoped, tag = 'input window, operand 1, single buffered']
    #allocation6 [shape = 's32[1]{0}', space=sflag, size = 0x4, scoped, tag = 'scoped memory for _neg_cosine_matrix.1']
    #allocation7 [shape = 'u8[65536]{0}', space=vmem, size = 0x10000, scoped, tag = 'output window, operand 0, single buffered']
    %7 = vsyncpa [#allocation3], 0
    %8 = vsyncpa [#allocation6], 0
    %9 = vsyncpa [#allocation4], 0
    // Predicated region
    $region2: #{_neg_cosine_matrix.1} parent=1 // pred_check
      _
    $region3: #{_neg_cosine_matrix.1} parent=1 // pred_check_branch
      %11 = sbr.rel (0) target = $region5
    $region4: #{_neg_cosine_matrix.1} parent=1 // pred_region
      %s13 = ssub.s32 1024, 1024
      %14 = vsyncadd [#allocation3], %s13
      %s15 = sshll.u32 [#allocation2], 4
      %s16 = int_to_ptr.vmem [resolvable:$true] %s15
      %21 = dma.hbm_to_vmem [thread:$0]  %s0, 1024, %s16, [#allocation3], 64, 64, 4
    $region5: #{_neg_cosine_matrix.1} parent=1 // pred_fallthru
      _
    // Predicated region
    $region6: #{_neg_cosine_matrix.1} parent=1 // pred_check
      _
    $region7: #{_neg_cosine_matrix.1} parent=1 // pred_check_branch
      %23 = sbr.rel (0) target = $region9
    $region8: #{_neg_cosine_matrix.1} parent=1 // pred_region
      %s25 = ssub.s32 1024, 1024
      %26 = vsyncadd [#allocation6], %s25
      %s27 = sshll.u32 [#allocation5], 4
      %s28 = int_to_ptr.vmem [resolvable:$true] %s27
      %33 = dma.hbm_to_vmem [thread:$0]  %s1, 1024, %s28, [#allocation6], 64, 64, 4
    $region9: #{_neg_cosine_matrix.1} parent=1 // pred_fallthru
      _
    // Predicated region
    $region10: #{_neg_cosine_matrix.1} parent=1 // pred_check
      _
    $region11: #{_neg_cosine_matrix.1} parent=1 // pred_check_branch
      %35 = sbr.rel (0) target = $region13
    $region12: #{_neg_cosine_matrix.1} parent=1 // pred_region
      %36 = dma.done [#allocation3], 1024
    $region13: #{_neg_cosine_matrix.1} parent=1 // pred_fallthru
      _
    // Predicated region
    $region14: #{_neg_cosine_matrix.1} parent=1 // pred_check
      _
    $region15: #{_neg_cosine_matrix.1} parent=1 // pred_check_branch
      %38 = sbr.rel (0) target = $region17
    $region16: #{_neg_cosine_matrix.1} parent=1 // pred_region
      %39 = dma.done [#allocation6], 1024
    $region17: #{_neg_cosine_matrix.1} parent=1 // pred_fallthru
      _
    %v41 = vld [vmem:[#allocation2] sm:$0xf]
    %v42 = vld [vmem:[#allocation2 + $0x4] sm:$0xf]
    %v43 = vld [vmem:[#allocation2 + $0x8] sm:$0xf]
    %v44 = vld [vmem:[#allocation2 + $0xc] sm:$0xf]
    %v45 = vld [vmem:[#allocation2 + $0x10] sm:$0xf]
    %v46 = vld [vmem:[#allocation2 + $0x14] sm:$0xf]
    %v47 = vld [vmem:[#allocation2 + $0x18] sm:$0xf]
    %v48 = vld [vmem:[#allocation2 + $0x1c] sm:$0xf]
    %v49 = vld [vmem:[#allocation2 + $0x20] sm:$0xf]
    %v50 = vld [vmem:[#allocation2 + $0x24] sm:$0xf]
    %v51 = vld [vmem:[#allocation2 + $0x28] sm:$0xf]
    %v52 = vld [vmem:[#allocation2 + $0x2c] sm:$0xf]
    %v53 = vld [vmem:[#allocation2 + $0x30] sm:$0xf]
    %v54 = vld [vmem:[#allocation2 + $0x34] sm:$0xf]
    %v55 = vld [vmem:[#allocation2 + $0x38] sm:$0xf]
    %v56 = vld [vmem:[#allocation2 + $0x3c] sm:$0xf]
    %v57 = vld [vmem:[#allocation5] sm:$0xf]
    %v58 = vld [vmem:[#allocation5 + $0x4] sm:$0xf]
    %v59 = vld [vmem:[#allocation5 + $0x8] sm:$0xf]
    %v60 = vld [vmem:[#allocation5 + $0xc] sm:$0xf]
    %v61 = vld [vmem:[#allocation5 + $0x10] sm:$0xf]
    %v62 = vld [vmem:[#allocation5 + $0x14] sm:$0xf]
    %v63 = vld [vmem:[#allocation5 + $0x18] sm:$0xf]
    %v64 = vld [vmem:[#allocation5 + $0x1c] sm:$0xf]
    %v65 = vld [vmem:[#allocation5 + $0x20] sm:$0xf]
    %v66 = vld [vmem:[#allocation5 + $0x24] sm:$0xf]
    %v67 = vld [vmem:[#allocation5 + $0x28] sm:$0xf]
    %v68 = vld [vmem:[#allocation5 + $0x2c] sm:$0xf]
    %v69 = vld [vmem:[#allocation5 + $0x30] sm:$0xf]
    %v70 = vld [vmem:[#allocation5 + $0x34] sm:$0xf]
    %v71 = vld [vmem:[#allocation5 + $0x38] sm:$0xf]
    %v72 = vld [vmem:[#allocation5 + $0x3c] sm:$0xf]
    %v89 = vunpack.c.l.b16 %v41
    %v90 = vunpack.c.l.b16 %v42
    %v91 = vunpack.c.l.b16 %v43
    %v92 = vunpack.c.l.b16 %v44
    %v93 = vunpack.c.l.b16 %v45
    %v94 = vunpack.c.l.b16 %v46
    %v95 = vunpack.c.l.b16 %v47
    %v96 = vunpack.c.l.b16 %v48
    %v97 = vunpack.c.l.b16 %v49
    %v98 = vunpack.c.l.b16 %v50
    %v99 = vunpack.c.l.b16 %v51
    %v100 = vunpack.c.l.b16 %v52
    %v101 = vunpack.c.l.b16 %v53
    %v102 = vunpack.c.l.b16 %v54
    %v103 = vunpack.c.l.b16 %v55
    %v104 = vunpack.c.l.b16 %v56
    %v105 = vpack.c.b16 %v90, %v89
    %v106 = vpack.c.b16 %v92, %v91
    %v107 = vpack.c.b16 %v94, %v93
    %v108 = vpack.c.b16 %v96, %v95
    %v109 = vpack.c.b16 %v98, %v97
    %v110 = vpack.c.b16 %v100, %v99
    %v111 = vpack.c.b16 %v102, %v101
    %v112 = vpack.c.b16 %v104, %v103
    %v137 = vunpack.c.l.b16 %v57
    %v138 = vunpack.c.l.b16 %v58
    %v139 = vunpack.c.l.b16 %v59
    %v140 = vunpack.c.l.b16 %v60
    %v141 = vunpack.c.l.b16 %v61
    %v142 = vunpack.c.l.b16 %v62
    %v143 = vunpack.c.l.b16 %v63
    %v144 = vunpack.c.l.b16 %v64
    %v145 = vunpack.c.l.b16 %v65
    %v146 = vunpack.c.l.b16 %v66
    %v147 = vunpack.c.l.b16 %v67
    %v148 = vunpack.c.l.b16 %v68
    %v149 = vunpack.c.l.b16 %v69
    %v150 = vunpack.c.l.b16 %v70
    %v151 = vunpack.c.l.b16 %v71
    %v152 = vunpack.c.l.b16 %v72
    %v153 = vpack.c.b16 %v138, %v137
    %v154 = vpack.c.b16 %v140, %v139
    %v155 = vpack.c.b16 %v142, %v141
    %v156 = vpack.c.b16 %v144, %v143
    %v157 = vpack.c.b16 %v146, %v145
    %v158 = vpack.c.b16 %v148, %v147
    %v159 = vpack.c.b16 %v150, %v149
    %v160 = vpack.c.b16 %v152, %v151
    %169 = vmatprep.subr.bf16.mxu0 0
    %170 = vmatpush1.bf16.xpose.msra.mxu0 %v153
    %171 = vmatprep.subr.bf16.mxu0 0
    %172 = vmatpush1.bf16.xpose.msra.mxu0 %v154
    %173 = vmatprep.subr.bf16.mxu0 0
    %174 = vmatpush1.bf16.xpose.msra.mxu0 %v155
    %175 = vmatprep.subr.bf16.mxu0 0
    %176 = vmatpush1.bf16.xpose.msra.mxu0 %v156
    %177 = vmatprep.subr.bf16.mxu0 0
    %178 = vmatpush1.bf16.xpose.msra.mxu0 %v157
    %179 = vmatprep.subr.bf16.mxu0 0
    %180 = vmatpush1.bf16.xpose.msra.mxu0 %v158
    %181 = vmatprep.subr.bf16.mxu0 0
    %182 = vmatpush1.bf16.xpose.msra.mxu0 %v159
    %183 = vmatprep.subr.bf16.mxu0 0
    %184 = vmatpush1.bf16.xpose.msra.mxu0 %v160
    %185 = vmatprep.subr.bf16.mxu0 0
    %186 = vmatpush1.bf16.xpose.msra.mxu0 0
    %187 = vmatprep.subr.bf16.mxu0 0
    %188 = vmatpush1.bf16.xpose.msra.mxu0 0
    %189 = vmatprep.subr.bf16.mxu0 0
    %190 = vmatpush1.bf16.xpose.msra.mxu0 0
    %191 = vmatprep.subr.bf16.mxu0 0
    %192 = vmatpush1.bf16.xpose.msra.mxu0 0
    %193 = vmatprep.subr.bf16.mxu0 0
    %194 = vmatpush1.bf16.xpose.msra.mxu0 0
    %195 = vmatprep.subr.bf16.mxu0 0
    %196 = vmatpush1.bf16.xpose.msra.mxu0 0
    %197 = vmatprep.subr.bf16.mxu0 0
    %198 = vmatpush1.bf16.xpose.msra.mxu0 0
    %199 = vmatprep.subr.bf16.mxu0 0
    %200 = vmatpush1.bf16.xpose.msra.mxu0 0
    %201 = vmatprep.mubr.bf16.mxu0 0
    %202 = vmatmul.mubr.bf16.gmra.mrb[0].mxu0 %v105
    %v203 = vpop.f32.mrb[0].mxu0
    %v204 = vadd.f32 0.0, %v203
    %v205 = vpop.f32.mrb[0].mxu0
    %v206 = vpop.f32.mrb[0].mxu0
    %v207 = vadd.f32 0.0, %v206
    %v208 = vpop.f32.mrb[0].mxu0
    %209 = vmatprep.mubr.bf16.mxu0 0
    %210 = vmatmul.mubr.bf16.gmra.mrb[0].mxu0 %v106
    %v211 = vpop.f32.mrb[0].mxu0
    %v212 = vadd.f32 0.0, %v211
    %v213 = vpop.f32.mrb[0].mxu0
    %v214 = vpop.f32.mrb[0].mxu0
    %v215 = vadd.f32 0.0, %v214
    %v216 = vpop.f32.mrb[0].mxu0
    %217 = vmatprep.mubr.bf16.mxu0 0
    %218 = vmatmul.mubr.bf16.gmra.mrb[0].mxu0 %v107
    %v219 = vpop.f32.mrb[0].mxu0
    %v220 = vadd.f32 0.0, %v219
    %v221 = vpop.f32.mrb[0].mxu0
    %v222 = vpop.f32.mrb[0].mxu0
    %v223 = vadd.f32 0.0, %v222
    %v224 = vpop.f32.mrb[0].mxu0
    %225 = vmatprep.mubr.bf16.mxu0 0
    %226 = vmatmul.mubr.bf16.gmra.mrb[0].mxu0 %v108
    %v227 = vpop.f32.mrb[0].mxu0
    %v228 = vadd.f32 0.0, %v227
    %v229 = vpop.f32.mrb[0].mxu0
    %v230 = vpop.f32.mrb[0].mxu0
    %v231 = vadd.f32 0.0, %v230
    %v232 = vpop.f32.mrb[0].mxu0
    %233 = vmatprep.mubr.bf16.mxu0 0
    %234 = vmatmul.mubr.bf16.gmra.mrb[0].mxu0 %v109
    %v235 = vpop.f32.mrb[0].mxu0
    %v236 = vadd.f32 0.0, %v235
    %v237 = vpop.f32.mrb[0].mxu0
    %v238 = vpop.f32.mrb[0].mxu0
    %v239 = vadd.f32 0.0, %v238
    %v240 = vpop.f32.mrb[0].mxu0
    %241 = vmatprep.mubr.bf16.mxu0 0
    %242 = vmatmul.mubr.bf16.gmra.mrb[0].mxu0 %v110
    %v243 = vpop.f32.mrb[0].mxu0
    %v244 = vadd.f32 0.0, %v243
    %v245 = vpop.f32.mrb[0].mxu0
    %v246 = vpop.f32.mrb[0].mxu0
    %v247 = vadd.f32 0.0, %v246
    %v248 = vpop.f32.mrb[0].mxu0
    %249 = vmatprep.mubr.bf16.mxu0 0
    %250 = vmatmul.mubr.bf16.gmra.mrb[0].mxu0 %v111
    %v251 = vpop.f32.mrb[0].mxu0
    %v252 = vadd.f32 0.0, %v251
    %v253 = vpop.f32.mrb[0].mxu0
    %v254 = vpop.f32.mrb[0].mxu0
    %v255 = vadd.f32 0.0, %v254
    %v256 = vpop.f32.mrb[0].mxu0
    %257 = vmatprep.mubr.bf16.mxu0 0
    %258 = vmatmul.mubr.bf16.gmra.mrb[0].mxu0 %v112
    %v259 = vpop.f32.mrb[0].mxu0
    %v260 = vadd.f32 0.0, %v259
    %v261 = vpop.f32.mrb[0].mxu0
    %v262 = vpop.f32.mrb[0].mxu0
    %v263 = vadd.f32 0.0, %v262
    %v264 = vpop.f32.mrb[0].mxu0
    %265 = vdwg.mxu0
    %v266 = vsub.f32 1.0, %v204
    %v267 = vsub.f32 1.0, %v207
    %v268 = vsub.f32 1.0, %v212
    %v269 = vsub.f32 1.0, %v215
    %v270 = vsub.f32 1.0, %v220
    %v271 = vsub.f32 1.0, %v223
    %v272 = vsub.f32 1.0, %v228
    %v273 = vsub.f32 1.0, %v231
    %v274 = vsub.f32 1.0, %v236
    %v275 = vsub.f32 1.0, %v239
    %v276 = vsub.f32 1.0, %v244
    %v277 = vsub.f32 1.0, %v247
    %v278 = vsub.f32 1.0, %v252
    %v279 = vsub.f32 1.0, %v255
    %v280 = vsub.f32 1.0, %v260
    %v281 = vsub.f32 1.0, %v263
    %282 = vst [vmem:[#allocation7] sm:$0xff] %v266
    %283 = vst [vmem:[#allocation7 + $0x8] sm:$0xff] %v267
    %284 = vst [vmem:[#allocation7 + $0x10] sm:$0xff] %v268
    %285 = vst [vmem:[#allocation7 + $0x18] sm:$0xff] %v269
    %286 = vst [vmem:[#allocation7 + $0x20] sm:$0xff] %v270
    %287 = vst [vmem:[#allocation7 + $0x28] sm:$0xff] %v271
    %288 = vst [vmem:[#allocation7 + $0x30] sm:$0xff] %v272
    %289 = vst [vmem:[#allocation7 + $0x38] sm:$0xff] %v273
    %290 = vst [vmem:[#allocation7 + $0x40] sm:$0xff] %v274
    %291 = vst [vmem:[#allocation7 + $0x48] sm:$0xff] %v275
    %292 = vst [vmem:[#allocation7 + $0x50] sm:$0xff] %v276
    %293 = vst [vmem:[#allocation7 + $0x58] sm:$0xff] %v277
    %294 = vst [vmem:[#allocation7 + $0x60] sm:$0xff] %v278
    %295 = vst [vmem:[#allocation7 + $0x68] sm:$0xff] %v279
    %296 = vst [vmem:[#allocation7 + $0x70] sm:$0xff] %v280
    %297 = vst [vmem:[#allocation7 + $0x78] sm:$0xff] %v281
    // Predicated region
    $region18: #{_neg_cosine_matrix.1} parent=1 // pred_check
      _
    $region19: #{_neg_cosine_matrix.1} parent=1 // pred_check_branch
      %299 = sbr.rel (0) target = $region21
    $region20: #{_neg_cosine_matrix.1} parent=1 // pred_region
      %s301 = ssub.s32 2048, 2048
      %302 = vsyncadd [#allocation4], %s301
      %s303 = sshll.u32 [#allocation7], 4
      %s304 = int_to_ptr.vmem [resolvable:$true] %s303
      %309 = dma.vmem_to_hbm [thread:$0]  %s304, 2048, %s2, [#allocation4], 128, 128, 8
    $region21: #{_neg_cosine_matrix.1} parent=1 // pred_fallthru
      _
    // Predicated region
    $region22: #{_neg_cosine_matrix.1} parent=1 // pred_check
      _
    $region23: #{_neg_cosine_matrix.1} parent=1 // pred_check_branch
      %311 = sbr.rel (0) target = $region25
    $region24: #{_neg_cosine_matrix.1} parent=1 // pred_region
      %312 = dma.done [#allocation4], 2048
    $region25: #{_neg_cosine_matrix.1} parent=1 // pred_fallthru
      _
    %313 = vsyncpa [#allocation3], 1
    %314 = vsyncpa [#allocation6], 1
    %315 = vsyncpa [#allocation4], 1

</llo_original>
